<compile_context>
chip_gen: v6e
topology: v6e:2x2x1
jax: 0.10.0
libtpu: 0.0.40
codegen_flags: <defaults>
</compile_context>

<pallas_src>
import functools

import jax
import jax.numpy as jnp
import numpy as np
from jax.experimental import pallas as pl
from jax.experimental.pallas import tpu as pltpu


def _drop_mse_kernel(mask_ref, p_ref, t_ref, o_ref, acc_ref, *,
                     inv_n, n_rows, tiles_per_par, rows_divisible):
    """Grid = (partition, row_tile, lane_tile).

    mask_ref : (1, TL) f32 block of the {0,1} drop mask (zero in padded lanes).
    p_ref/t_ref : (tr, TL) lane-dense input blocks (boundary blocks may contain
                  garbage rows/lanes — zeroed below via jnp.where).
    acc_ref  : (1, TL) f32 VMEM scratch — lane-resident partial sums (per-step
               sublane reduce on the XLU keeps the steady state VPU/DMA-only).
    o_ref    : (1, 1) f32 SMEM per-partition partial, written at the last step.
    """
    par = pl.program_id(0)
    r = pl.program_id(1)
    l = pl.program_id(2)

    @pl.when(jnp.logical_and(r == 0, l == 0))
    def _init():
        acc_ref[...] = jnp.zeros_like(acc_ref)

    p = p_ref[...].astype(jnp.float32)
    t = t_ref[...].astype(jnp.float32)

    # mask is {0.0, 1.0}; padded lanes are 0.0.  jnp.where (select) also
    # squashes any NaN/Inf garbage coming from boundary-block reads.
    keep = mask_ref[...] > 0.0                        # (1, TL) bool
    if not rows_divisible:
        tr = p_ref.shape[0]
        row0 = (par * tiles_per_par + r) * tr
        rows = jax.lax.broadcasted_iota(jnp.int32, p.shape, 0) + row0
        keep = jnp.logical_and(keep, rows < n_rows)   # (tr, TL) bool

    diff = jnp.where(keep, p - t, jnp.float32(0.0))   # broadcasts over rows
    # Per-step sublane reduce (XLU slot, free while HBM/VPU-bound).
    acc_ref[...] += jnp.sum(diff * diff, axis=0, keepdims=True)

    @pl.when(jnp.logical_and(r == pl.num_programs(1) - 1,
                             l == pl.num_programs(2) - 1))
    def _finalize():
        # Single cross-lane reduce per partition + mean scaling.
        o_ref[0, 0] = jnp.sum(acc_ref[...]) * jnp.float32(inv_n)


def drop_mse_loss(predict, target, *, drop=0.5, key=None, reduction="mean",
                  tile_bytes_budget=8 << 20):
    """JAX/Pallas equivalent of DropMSELoss.forward (reduction='mean')."""
    assert predict.shape == target.shape
    # TODO(synk): 'sum' / 'none' reductions are not implemented.
    assert reduction == "mean"

    *lead, H, W = predict.shape
    n_lead = int(np.prod(lead)) if lead else 1
    L0 = H * W
    n_total = n_lead * L0

    if key is None:
        key = jax.random.PRNGKey(0)
    # torch.rand(H, W) equivalent; mask = 1.0 where rand > drop else 0.0.
    # (JAX PRNG will not bit-match torch.rand for a given seed.)
    rand = jax.random.uniform(key, (H, W), dtype=jnp.float32)
    mask_hw = jnp.where(rand > drop, 1.0, 0.0).astype(jnp.float32)

    # Lane-dense 2D views — reshape of contiguous data, no HBM copy.
    p2 = predict.reshape(n_lead, L0)
    t2 = target.reshape(n_lead, L0)
    mask2 = mask_hw.reshape(1, L0)

    itemsize = jnp.dtype(predict.dtype).itemsize

    # Generation-aware VMEM cap (v7x: 64 MiB per TensorCore; v5e/v6e: 128 MiB).
    try:
        vmem_cap = int(pltpu.get_tpu_info().vmem_capacity_bytes)
    except Exception:
        vmem_cap = 64 << 20  # conservative (v7x)
    # Keep 2 inputs x 2 pipeline buffers x tile well inside the cap.
    budget = min(int(tile_bytes_budget),
                 max(1 << 20, (vmem_cap - (16 << 20)) // 4))

    # ---- Tile geometry (no padding of predict / target). ----
    if 8 * L0 * itemsize > budget:
        # Huge rows: tile the lane dimension too (multiple of 128).
        TL = max(128, (budget // (8 * itemsize)) // 128 * 128)
        n_lane_tiles = -(-L0 // TL)
        tr = 8 if n_lead >= 8 else n_lead
    else:
        TL = L0                      # block last dim == full array dim -> OK
        n_lane_tiles = 1
        if n_lead <= 8:
            tr = n_lead              # block dim == full array dim -> OK
        else:
            tr = max(8, min((budget // (L0 * itemsize)) // 8 * 8,
                            (n_lead // 8) * 8))
    Lp = n_lane_tiles * TL
    if Lp != L0:
        # Only the tiny mask is padded (zeros -> dropped lanes contribute 0).
        mask2 = jnp.pad(mask2, ((0, 0), (0, Lp - L0)))

    rows_divisible = (n_lead % tr == 0)
    n_row_tiles = -(-n_lead // tr)
    # 2-way 'parallel' partition (v7x megacore) only when it splits evenly —
    # avoids out-of-range blocks and imbalance; harmless on 1-TC chips.
    n_par = 2 if (n_row_tiles >= 2 and n_row_tiles % 2 == 0) else 1
    tiles_per_par = n_row_tiles // n_par

    tile_in_bytes = tr * TL * itemsize
    vmem_need = 2 * 2 * tile_in_bytes + 3 * TL * 4 + (1 << 16)
    vmem_limit = int(max(32 << 20,
                         min(vmem_need + (2 << 20), vmem_cap - (8 << 20))))

    cost = pl.CostEstimate(
        flops=int(4 * n_total),
        transcendentals=0,
        bytes_accessed=int(2 * n_total * itemsize + Lp * 4 + n_par * 4),
    )

    inv_n = 1.0 / float(n_total)

    out = pl.pallas_call(
        functools.partial(_drop_mse_kernel, inv_n=inv_n, n_rows=n_lead,
                          tiles_per_par=tiles_per_par,
                          rows_divisible=rows_divisible),
        out_shape=jax.ShapeDtypeStruct((n_par, 1), jnp.float32),
        grid_spec=pltpu.PrefetchScalarGridSpec(
            num_scalar_prefetch=0,
            grid=(n_par, tiles_per_par, n_lane_tiles),
            in_specs=[
                # mask: one lane-dense block per lane tile (resident if 1 tile)
                pl.BlockSpec((1, TL), lambda p, r, l: (0, l)),
                # predict / target: VMEM-budgeted (tr, TL) slabs
                pl.BlockSpec((tr, TL),
                             lambda p, r, l: (p * tiles_per_par + r, l)),
                pl.BlockSpec((tr, TL),
                             lambda p, r, l: (p * tiles_per_par + r, l)),
            ],
            # per-partition scalar partial sum in SMEM
            out_specs=pl.BlockSpec((1, 1), lambda p, r, l: (p, 0),
                                   memory_space=pltpu.MemorySpace.SMEM),
            scratch_shapes=[pltpu.VMEM((1, TL), jnp.float32)],
        ),
        compiler_params=pltpu.CompilerParams(
            dimension_semantics=("parallel", "arbitrary", "arbitrary"),
            vmem_limit_bytes=vmem_limit,
        ),
        cost_estimate=cost,
    )(mask2, p2, t2)

    # Sum the per-partition partials (each already scaled by 1/N).
    return jnp.sum(out)


if __name__ == "__main__":
    key = jax.random.PRNGKey(0)
    k_pred, k_tgt, k_mask = jax.random.split(key, 3)

    B, C, H, W = 2, 4, 16, 16
    predict = jax.random.normal(k_pred, (B, C, H, W), dtype=jnp.float32)
    target = jax.random.normal(k_tgt, (B, C, H, W), dtype=jnp.float32)

    drop = 0.5
    loss = drop_mse_loss(predict, target, drop=drop, key=k_mask)
    loss = jax.block_until_ready(loss)

    # Plain-JAX reference using the same mask.
    rand = jax.random.uniform(k_mask, (H, W), dtype=jnp.float32)
    mask_hw = jnp.where(rand > drop, 1.0, 0.0).astype(jnp.float32)
    mask4 = mask_hw.reshape(1, 1, H, W)
    ref = jnp.mean((mask4 * predict - mask4 * target) ** 2)

    assert np.allclose(np.asarray(loss), np.asarray(ref),
                       rtol=1e-5, atol=1e-6), (float(loss), float(ref))
    print("KERNEL_OK")
</pallas_src>

<mosaic_0001>
module attributes {stable_mosaic.version = 11 : i64} {
  func.func @_drop_mse_kernel(%arg0: i32, %arg1: i32, %arg2: i32, %arg3: memref<1x256xf32, #tpu.memory_space<vmem>>, %arg4: memref<8x256xf32, #tpu.memory_space<vmem>>, %arg5: memref<8x256xf32, #tpu.memory_space<vmem>>, %arg6: memref<1x1xf32, #tpu.memory_space<smem>>, %arg7: memref<1x256xf32, #tpu.memory_space<vmem>>) attributes {dimension_semantics = [#tpu.dimension_semantics<parallel>, #tpu.dimension_semantics<arbitrary>, #tpu.dimension_semantics<arbitrary>], iteration_bounds = array<i64: 1, 1, 1>, scalar_prefetch = 0 : i64, scratch_operands = 1 : i64, tpu.core_type = #tpu.core_type<tc>, window_params = [{transform_indices = @transform_0, window_bounds = array<i64: 1, 256>}, {transform_indices = @transform_1, window_bounds = array<i64: 8, 256>}, {transform_indices = @transform_2, window_bounds = array<i64: 8, 256>}, {transform_indices = @transform_3, window_bounds = array<i64: 1, 1>}]} {
    %c0_i32 = arith.constant 0 : i32
    %0 = arith.cmpi eq, %arg1, %c0_i32 : i32
    %c0_i32_0 = arith.constant 0 : i32
    %1 = arith.cmpi eq, %arg2, %c0_i32_0 : i32
    %2 = arith.andi %0, %1 : i1
    %3 = arith.extui %2 : i1 to i32
    %c0_i32_1 = arith.constant 0 : i32
    %4 = arith.cmpi ne, %3, %c0_i32_1 : i32
    scf.if %4 {
      %cst_16 = arith.constant 0.000000e+00 : f32
      %26 = vector.broadcast %cst_16 : f32 to vector<1x256xf32>
      %c0_17 = arith.constant 0 : index
      %c0_18 = arith.constant 0 : index
      %27 = vector.load %arg7[%c0_17, %c0_18] : memref<1x256xf32, #tpu.memory_space<vmem>>, vector<1x256xf32>
      tpu.vector_store %arg7[%c0_17, %c0_18], %26 {strides = array<i32>} : memref<1x256xf32, #tpu.memory_space<vmem>>, vector<1x256xf32>,
    } else {
    }
    %c0 = arith.constant 0 : index
    %c0_2 = arith.constant 0 : index
    %5 = vector.load %arg4[%c0, %c0_2] : memref<8x256xf32, #tpu.memory_space<vmem>>, vector<8x256xf32>
    %c0_3 = arith.constant 0 : index
    %c0_4 = arith.constant 0 : index
    %6 = vector.load %arg5[%c0_3, %c0_4] : memref<8x256xf32, #tpu.memory_space<vmem>>, vector<8x256xf32>
    %c0_5 = arith.constant 0 : index
    %c0_6 = arith.constant 0 : index
    %7 = vector.load %arg3[%c0_5, %c0_6] : memref<1x256xf32, #tpu.memory_space<vmem>>, vector<1x256xf32>
    %cst = arith.constant 0.000000e+00 : f32
    %8 = vector.broadcast %cst : f32 to vector<1x256xf32>
    %9 = arith.cmpf ogt, %7, %8 : vector<1x256xf32>
    %10 = arith.subf %5, %6 : vector<8x256xf32>
    %cst_7 = arith.constant 0.000000e+00 : f32
    %11 = vector.shape_cast %9 : vector<1x256xi1> to vector<1x256xi1>
    %12 = vector.broadcast %11 : vector<1x256xi1> to vector<8x256xi1>
    %13 = vector.broadcast %cst_7 : f32 to vector<8x256xf32>
    %14 = arith.select %12, %10, %13 : vector<8x256xi1>, vector<8x256xf32>
    %c0_8 = arith.constant 0 : index
    %c0_9 = arith.constant 0 : index
    %15 = vector.load %arg7[%c0_8, %c0_9] : memref<1x256xf32, #tpu.memory_space<vmem>>, vector<1x256xf32>
    %16 = arith.mulf %14, %14 : vector<8x256xf32>
    %cst_10 = arith.constant dense<0.000000e+00> : vector<256xf32>
    %17 = vector.multi_reduction <add>, %16, %cst_10 [0] : vector<8x256xf32> to vector<256xf32>
    %18 = vector.shape_cast %17 : vector<256xf32> to vector<1x256xf32>
    %19 = arith.addf %15, %18 : vector<1x256xf32>
    %c0_11 = arith.constant 0 : index
    %c0_12 = arith.constant 0 : index
    %20 = vector.load %arg7[%c0_11, %c0_12] : memref<1x256xf32, #tpu.memory_space<vmem>>, vector<1x256xf32>
    tpu.vector_store %arg7[%c0_11, %c0_12], %19 {strides = array<i32>} : memref<1x256xf32, #tpu.memory_space<vmem>>, vector<1x256xf32>,
    %c0_i32_13 = arith.constant 0 : i32
    %21 = arith.cmpi eq, %arg1, %c0_i32_13 : i32
    %c0_i32_14 = arith.constant 0 : i32
    %22 = arith.cmpi eq, %arg2, %c0_i32_14 : i32
    %23 = arith.andi %21, %22 : i1
    %24 = arith.extui %23 : i1 to i32
    %c0_i32_15 = arith.constant 0 : i32
    %25 = arith.cmpi ne, %24, %c0_i32_15 : i32
    scf.if %25 {
      %c0_16 = arith.constant 0 : index
      %c0_17 = arith.constant 0 : index
      %26 = vector.load %arg7[%c0_16, %c0_17] : memref<1x256xf32, #tpu.memory_space<vmem>>, vector<1x256xf32>
      %27 = vector.shape_cast %26 : vector<1x256xf32> to vector<1x1x256xf32>
      %cst_18 = arith.constant dense<0.000000e+00> : vector<1xf32>
      %28 = vector.multi_reduction <add>, %27, %cst_18 [1, 2] : vector<1x1x256xf32> to vector<1xf32>
      %29 = vector.shape_cast %28 : vector<1xf32> to vector<1x1x1xf32>
      %30 = vector.extract %29[0, 0, 0] : f32 from vector<1x1x1xf32>
      %cst_19 = arith.constant 4.8828125E-4 : f32
      %31 = arith.mulf %30, %cst_19 : f32
      %c0_20 = arith.constant 0 : index
      %c0_21 = arith.constant 0 : index
      %32 = memref.load %arg6[%c0_20, %c0_21] : memref<1x1xf32, #tpu.memory_space<smem>>
      memref.store %31, %arg6[%c0_20, %c0_21] : memref<1x1xf32, #tpu.memory_space<smem>>
    } else {
    }
    return
  }
  func.func @transform_0(%arg0: i32, %arg1: i32, %arg2: i32) -> (i32, i32) {
    %c0_i32 = arith.constant 0 : i32
    %c0_i32_0 = arith.constant 0 : i32
    return %c0_i32, %arg2 : i32, i32
  }
  func.func @transform_1(%arg0: i32, %arg1: i32, %arg2: i32) -> (i32, i32) {
    %c1_i32 = arith.constant 1 : i32
    %0 = arith.muli %arg0, %c1_i32 : i32
    %1 = arith.addi %0, %arg1 : i32
    %c0_i32 = arith.constant 0 : i32
    return %1, %arg2 : i32, i32
  }
  func.func @transform_2(%arg0: i32, %arg1: i32, %arg2: i32) -> (i32, i32) {
    %c1_i32 = arith.constant 1 : i32
    %0 = arith.muli %arg0, %c1_i32 : i32
    %1 = arith.addi %0, %arg1 : i32
    %c0_i32 = arith.constant 0 : i32
    return %1, %arg2 : i32, i32
  }
  func.func @transform_3(%arg0: i32, %arg1: i32, %arg2: i32) -> (i32, i32) {
    %c0_i32 = arith.constant 0 : i32
    %c0_i32_0 = arith.constant 0 : i32
    return %arg0, %c0_i32 : i32, i32
  }
}

</mosaic_0001>

<llo_original>
// kernel: tpu_custom_call.1
$region0: #{tpu_custom_call.1}
  #allocation0 [shape = 'u32[]', space=smem, size = 0x4, offset = 0x4, fixed_abs, tag = 'smem constant byte address 0x4 - core index']
  #allocation1 [shape = 'u32[144,128]{1,0:T(1,128)}', space=vmem, size = 0x12000, scoped, tag = 'internal scratch']
  #allocation2 [shape = 'f32[1,256]{1,0:T(1,128)}', space=vmem, size = 0x400, scoped, tag = 'scratch operand']
  %s0 = inlined_call_operand.hbm [shape: f32[1,256], index: 0, kind: input, shape index: {}]
  %s1 = inlined_call_operand.hbm [shape: f32[8,256], index: 1, kind: input, shape index: {}]
  %s2 = inlined_call_operand.hbm [shape: f32[8,256], index: 2, kind: input, shape index: {}]
  %s3 = inlined_call_operand.hbm [shape: f32[1,1], index: 3, kind: output, shape index: {}]
  %s4 = sld [smem:[#allocation0]]
  $region42: #{tpu_custom_call.1} parent=0
    _
  %s6 = ssub.s32 1, %s4
  %s7 = scalar_select 0, %s6, %s4
  $region1: #{tpu_custom_call.1} parent=0
    #allocation3 [shape = 'u8[1024]{0}', space=vmem, size = 0x400, scoped, tag = 'input window, operand 0, single buffered']
    #allocation4 [shape = 's32[1]{0}', space=sflag, size = 0x4, scoped, tag = 'scoped memory for tpu_custom_call.1']
    #allocation5 [shape = 's32[1]{0}', space=sflag, size = 0x4, scoped, tag = 'scoped memory for tpu_custom_call.1']
    #allocation6 [shape = 'u8[8192]{0}', space=vmem, size = 0x2000, scoped, tag = 'input window, operand 1, single buffered']
    #allocation7 [shape = 's32[1]{0}', space=sflag, size = 0x4, scoped, tag = 'scoped memory for tpu_custom_call.1']
    #allocation8 [shape = 'u8[8192]{0}', space=vmem, size = 0x2000, scoped, tag = 'input window, operand 2, single buffered']
    #allocation9 [shape = 'u8[512]{0}', space=smem, size = 0x200, scoped, tag = 'output window, operand 0, single buffered']
    %8 = vsyncpa [#allocation4], 0
    %9 = vsyncpa [#allocation7], 0
    %10 = vsyncpa [#allocation5], 0
    // Predicated region
    $region2: #{tpu_custom_call.1} parent=1 // pred_check
      _
    $region3: #{tpu_custom_call.1} parent=1 // pred_check_branch
      %12 = sbr.rel (0) target = $region5
    $region4: #{tpu_custom_call.1} parent=1 // pred_region
      %s14 = ssub.s32 32, 32
      %15 = vsyncadd [#allocation4], %s14
      %s17 = sshll.u32 [#allocation3], 4
      %s18 = int_to_ptr.vmem [resolvable:$true] %s17
      %20 = dma.hbm_to_vmem [thread:$0]  %s0, 32, %s18, [#allocation4]
    $region5: #{tpu_custom_call.1} parent=1 // pred_fallthru
      _
    // Predicated region
    $region6: #{tpu_custom_call.1} parent=1 // pred_check
      _
    $region7: #{tpu_custom_call.1} parent=1 // pred_check_branch
      %22 = sbr.rel (0) target = $region9
    $region8: #{tpu_custom_call.1} parent=1 // pred_region
      %s23 = sadd.s32 0, 0
      %s25 = ssub.s32 256, 256
      %26 = vsyncadd [#allocation7], %s25
      %s27 = smul.addr %s23, 2
      %s28 = smul.addr %s27, 128
      %s29 = scalar_lea.hbm %s1, %s28
      %s31 = sshll.u32 [#allocation6], 4
      %s32 = int_to_ptr.vmem [resolvable:$true] %s31
      %34 = dma.hbm_to_vmem [thread:$0]  %s29, 256, %s32, [#allocation7]
    $region9: #{tpu_custom_call.1} parent=1 // pred_fallthru
      _
    // Predicated region
    $region10: #{tpu_custom_call.1} parent=1 // pred_check
      _
    $region11: #{tpu_custom_call.1} parent=1 // pred_check_branch
      %36 = sbr.rel (0) target = $region13
    $region12: #{tpu_custom_call.1} parent=1 // pred_region
      %s37 = sadd.s32 0, 0
      %s39 = ssub.s32 256, 256
      %40 = vsyncadd [#allocation7], %s39
      %s41 = smul.addr %s37, 2
      %s42 = smul.addr %s41, 128
      %s43 = scalar_lea.hbm %s2, %s42
      %s45 = sshll.u32 [#allocation8], 4
      %s46 = int_to_ptr.vmem [resolvable:$true] %s45
      %48 = dma.hbm_to_vmem [thread:$0]  %s43, 256, %s46, [#allocation7]
    $region13: #{tpu_custom_call.1} parent=1 // pred_fallthru
      _
    // Predicated region
    $region14: #{tpu_custom_call.1} parent=1 // pred_check
      _
    $region15: #{tpu_custom_call.1} parent=1 // pred_check_branch
      %50 = sbr.rel (0) target = $region17
    $region16: #{tpu_custom_call.1} parent=1 // pred_region
      %51 = dma.done [#allocation4], 32
    $region17: #{tpu_custom_call.1} parent=1 // pred_fallthru
      _
    // Predicated region
    $region18: #{tpu_custom_call.1} parent=1 // pred_check
      _
    $region19: #{tpu_custom_call.1} parent=1 // pred_check_branch
      %53 = sbr.rel (0) target = $region21
    $region20: #{tpu_custom_call.1} parent=1 // pred_region
      %54 = dma.done [#allocation7], 256
    $region21: #{tpu_custom_call.1} parent=1 // pred_fallthru
      _
    // Predicated region
    $region22: #{tpu_custom_call.1} parent=1 // pred_check
      _
    $region23: #{tpu_custom_call.1} parent=1 // pred_check_branch
      %56 = sbr.rel (0) target = $region25
    $region24: #{tpu_custom_call.1} parent=1 // pred_region
      %57 = dma.done [#allocation7], 256
    $region25: #{tpu_custom_call.1} parent=1 // pred_fallthru
      _
    %s58 = sadd.s32 0, 0
    %s59 = sadd.s32 0, 0
    %p60 = scmp.eq.s32.totalorder 0, 0
    %p61 = scmp.eq.s32.totalorder 0, 0
    %p62 = pnand %p60, %p61
    %p63 = pneg %p62
    // Predicated region
    $region26: #{tpu_custom_call.1} parent=1 // pred_check
      _
    $region27: #{tpu_custom_call.1} parent=1 // pred_check_branch
      %65 = sbr.rel (%p62) target = $region29
    $region28: #{tpu_custom_call.1} parent=1 // pred_region
      %v66 = vlaneseq
      %vm67 = vcmp.ge.s32.totalorder %v66, 0
      %vm68 = vcmp.lt.s32.totalorder %v66, 256
      %vm69 = vmand %vm67, %vm68
      %70 = vst.msk [vmem:[#allocation2] sm:$0x3] %vm69, 0.0
    $region29: #{tpu_custom_call.1} parent=1 // pred_fallthru
      _
    %v71 = vld [vmem:[#allocation6] sm:$0xff]
    %v72 = vld [vmem:[#allocation6 + $0x8] sm:$0xff]
    %v73 = vld [vmem:[#allocation8] sm:$0xff]
    %v74 = vld [vmem:[#allocation8 + $0x8] sm:$0xff]
    %v75 = vld [vmem:[#allocation3] sm:$0x3]
    %vm76 = vcmp.gt.f32.partialorder %v75, 0.0
    %v77 = vsub.f32 %v71, %v73
    %v78 = vsub.f32 %v72, %v74
    %v79 = vsel %vm76, 1, 0
    %v80 = vlaneseq
    %v81 = vshrl.u32 %v80, 7
    %v82 = vsub.s32 0, %v81
    %v83 = vrot.slane %v79, %v82
    %v84 = vlaneseq
    %v85 = vshrl.u32 %v84, 7
    %v86 = vsub.s32 1, %v85
    %v87 = vrot.slane %v79, %v86
    %vm88 = vcmp.eq.s32.totalorder %v83, 1
    %vm89 = vcmp.eq.s32.totalorder %v87, 1
    %v90 = vsel %vm88, %v77, 0.0
    %v91 = vsel %vm89, %v78, 0.0
    %v92 = vld [vmem:[#allocation2] sm:$0x3]
    %v93 = vmul.f32 %v90, %v90
    %v94 = vmul.f32 %v91, %v91
    %v95 = vrot.slane %v93, 4
    %v96 = vadd.f32 %v93, %v95
    %v97 = vrot.slane %v96, 2
    %v98 = vadd.f32 %v96, %v97
    %v99 = vrot.slane %v98, 1
    %v100 = vadd.f32 %v98, %v99
    %v101 = vrot.slane %v94, 4
    %v102 = vadd.f32 %v94, %v101
    %v103 = vrot.slane %v102, 2
    %v104 = vadd.f32 %v102, %v103
    %v105 = vrot.slane %v104, 1
    %v106 = vadd.f32 %v104, %v105
    %v109 = vcombine.low %v100, %v106
    %v111 = vunpack.c.l.s4 1966171168
    %v112 = vunpack.c.0.s8 %v111
    %v113 = vlaneseq
    %v114 = vshrl.u32 %v113, 7
    %v115 = vsub.s32 %v112, %v114
    %v116 = vrot.slane %v109, %v115
    %v118 = vunpack.c.l.s4 1966171168
    %v119 = vunpack.c.0.s8 %v118
    %v120 = vlaneseq
    %v121 = vshrl.u32 %v120, 7
    %v122 = vsub.s32 %v119, %v121
    %v123 = vrot.slane %v116, %v122
    %v125 = vadd.f32 %v92, %v123
    %v126 = vlaneseq
    %vm127 = vcmp.ge.s32.totalorder %v126, 0
    %vm128 = vcmp.lt.s32.totalorder %v126, 256
    %vm129 = vmand %vm127, %vm128
    %130 = vst.msk [vmem:[#allocation2] sm:$0x3] %vm129, %v125
    // Predicated region
    $region30: #{tpu_custom_call.1} parent=1 // pred_check
      _
    $region31: #{tpu_custom_call.1} parent=1 // pred_check_branch
      %132 = sbr.rel (%p62) target = $region33
    $region32: #{tpu_custom_call.1} parent=1 // pred_region
      %v133 = vld [vmem:[#allocation2] sm:$0x3]
      %v135 = vlaneseq
      %v136 = vshrl.u32 %v135, 7
      %v137 = vsub.s32 0, %v136
      %v138 = vrot.slane %v133, %v137
      %v139 = vlaneseq
      %v140 = vshrl.u32 %v139, 7
      %v141 = vsub.s32 1, %v140
      %v142 = vrot.slane %v133, %v141
      %vm145 = vcmask 1040384
      %v146 = vsel %vm145, %v138, 0.0
      %v147 = vsel %vm145, %v142, 0.0
      %v148 = vadd.f32 %v146, %v147
      %149 = vadd.xlane.f32.xlu0 %v148
      %v150 = vpop.xlane.xlu0 %149
      %v151 = vrot.slane %v150, 4
      %v152 = vadd.f32 %v150, %v151
      %v153 = vrot.slane %v152, 2
      %v154 = vadd.f32 %v152, %v153
      %v155 = vrot.slane %v154, 1
      %v156 = vadd.f32 %v154, %v155
      %s157 = vtos %v156
      %s158 = smul.f32 %s157, 0.00048828125
      %s159 = scalar_lea.smem [#allocation9], 0
      %160 = sst [smem:[%s159]] %s158
    $region33: #{tpu_custom_call.1} parent=1 // pred_fallthru
      _
    // Predicated region
    $region34: #{tpu_custom_call.1} parent=1 // pred_check
      _
    $region35: #{tpu_custom_call.1} parent=1 // pred_check_branch
      %162 = sbr.rel (0) target = $region37
    $region36: #{tpu_custom_call.1} parent=1 // pred_region
      %s164 = ssub.s32 16, 16
      %165 = vsyncadd [#allocation5], %s164
      %168 = dma.smem_to_hbm [#allocation9], 16, %s3, [#allocation5]
    $region37: #{tpu_custom_call.1} parent=1 // pred_fallthru
      _
    // Predicated region
    $region38: #{tpu_custom_call.1} parent=1 // pred_check
      _
    $region39: #{tpu_custom_call.1} parent=1 // pred_check_branch
      %170 = sbr.rel (0) target = $region41
    $region40: #{tpu_custom_call.1} parent=1 // pred_region
      %171 = dma.done [#allocation5], 16
    $region41: #{tpu_custom_call.1} parent=1 // pred_fallthru
      _
    %172 = sfence
    %173 = vsyncpa [#allocation4], 1
    %174 = vsyncpa [#allocation7], 1
    %175 = vsyncpa [#allocation5], 1

</llo_original>
